<compile_context>
chip_gen: v5e
topology: v5e:2x2
jax: 0.10.0
libtpu: 0.0.40
codegen_flags: <defaults>
</compile_context>

<pallas_src>
import functools

import jax
import jax.numpy as jnp
from jax.experimental import pallas as pl
from jax.experimental.pallas import tpu as pltpu


# ----------------------------------------------------------------------------
# small helpers: rounding, generation-aware VMEM budget, tile selection
# ----------------------------------------------------------------------------
def _round_up(x, m):
    return (x + m - 1) // m * m


def _vmem_capacity_bytes():
    """Per-core VMEM capacity; conservative 64 MiB (v7x) fallback."""
    try:
        info = pltpu.get_tpu_info()
        cap = getattr(info, "vmem_capacity_bytes", None)
        if cap:
            return int(cap)
    except Exception:
        pass
    return 64 * 1024 * 1024


def _vmem_budget():
    # leave Mosaic headroom: ~56 MiB on v7x (64 MiB), ~112 MiB on v5e/v6e (128 MiB)
    return (_vmem_capacity_bytes() * 7) // 8


def _vmem_limit(block_bytes, budget):
    """Scoped VMEM limit: double-buffered block footprint * 1.5, capped at budget."""
    return int(min(budget, max(32 * 1024 * 1024, block_bytes * 3)))


def _choose_vocab_tile(v, d, budget, tv_target=2048, tm_probe=512):
    """Lane-dense vocab tile (multiple of 128, targets multiple of 256) sized so the
    head-kernel bf16 blocks fit the per-generation VMEM budget."""
    tv = min(tv_target, _round_up(v, 128))

    def footprint(t):  # double-buffered bf16 blocks of the head kernel
        return 2 * 2 * (tm_probe * d + d * t + tm_probe * t)

    while footprint(tv) > budget and tv > 256 and (tv // 2) % 128 == 0:
        tv //= 2
    vp = _round_up(v, tv)
    return tv, vp


def _choose_row_tile(m, target=512):
    """Row tile (multiple of 8, <=target); M is padded up so tm always divides Mp
    (no degenerate tm==M fallback)."""
    tm = min(target, _round_up(m, 8))
    mp = _round_up(m, tm)
    return tm, mp


# ----------------------------------------------------------------------------
# Pallas kernel 1: Projected_Adaptor ("output" position), hoisted out of the
# LM-head vocab loop. Grid over batch (switch values are per-batch); computes
#   adapt_b = hidden_b + eps * ((hidden_b @ P1f) * sv_rep_b) @ P2f
# once in f32 and writes the bf16 adapted activation consumed by the head kernel.
# ----------------------------------------------------------------------------
def _adapter_kernel(h_ref, svr_ref, p1f_ref, p2f_ref, out_ref, *, epsilon):
    h = h_ref[0]                                                         # (S, D) f32
    sv_row = svr_ref[0]                                                  # (1, KRp)
    t = jnp.dot(h, p1f_ref[...], preferred_element_type=jnp.float32)    # (S, KRp)
    t = t * sv_row                                                       # per-batch scale
    delta = jnp.dot(t, p2f_ref[...], preferred_element_type=jnp.float32)  # (S, D)
    out_ref[0] = (h + epsilon * delta).astype(out_ref.dtype)


def adapter_precompute(hidden, svr3, p1f, p2f, *, epsilon, budget):
    B, S, D = hidden.shape
    KRp = p1f.shape[1]
    block_bytes = S * D * 4 + KRp * 4 + D * KRp * 4 + KRp * D * 4 + S * D * 2
    kernel = functools.partial(_adapter_kernel, epsilon=epsilon)
    return pl.pallas_call(
        kernel,
        out_shape=jax.ShapeDtypeStruct((B, S, D), jnp.bfloat16),
        grid=(B,),
        in_specs=[
            pl.BlockSpec((1, S, D), lambda b: (b, 0, 0)),     # hidden, one batch row
            pl.BlockSpec((1, 1, KRp), lambda b: (b, 0, 0)),   # switch scales (B,1,KRp)
            pl.BlockSpec((D, KRp), lambda b: (0, 0)),         # projector 1 (flattened)
            pl.BlockSpec((KRp, D), lambda b: (0, 0)),         # projector 2 (flattened)
        ],
        out_specs=pl.BlockSpec((1, S, D), lambda b: (b, 0, 0)),
        compiler_params=pltpu.CompilerParams(
            dimension_semantics=("parallel",),
            vmem_limit_bytes=_vmem_limit(block_bytes, budget)),
    )(hidden, svr3, p1f, p2f)


# ----------------------------------------------------------------------------
# Pallas kernel 2: LM head matmul  logits = adapt @ W_lm^T
# Streams bf16: adapt tiles (tm, D) and pre-prepped weight tiles (D, tv).
# Vocab axis is the OUTER grid axis so the (D, Vp) weight is streamed from HBM
# exactly once; the small bf16 activation is re-streamed per vocab tile.
# Output is bf16 (halves the logits HBM round trip into the CE kernel).
# ----------------------------------------------------------------------------
def _lm_head_kernel(a_ref, wt_ref, out_ref):
    out_ref[...] = jnp.dot(a_ref[...], wt_ref[...],
                           preferred_element_type=jnp.float32).astype(out_ref.dtype)


def lm_head_matmul(adapt2d, lm_head_t, *, tm, tv, budget):
    Mp, D = adapt2d.shape
    Vp = lm_head_t.shape[1]
    block_bytes = (tm * D + D * tv + tm * tv) * 2                        # bf16 blocks
    return pl.pallas_call(
        _lm_head_kernel,
        out_shape=jax.ShapeDtypeStruct((Mp, Vp), jnp.bfloat16),
        grid=(Vp // tv, Mp // tm),                  # vocab outer -> weight streamed once
        in_specs=[
            pl.BlockSpec((tm, D), lambda j, i: (i, 0)),
            pl.BlockSpec((D, tv), lambda j, i: (0, j)),
        ],
        out_specs=pl.BlockSpec((tm, tv), lambda j, i: (i, j)),
        compiler_params=pltpu.CompilerParams(
            dimension_semantics=("parallel", "parallel"),
            vmem_limit_bytes=_vmem_limit(block_bytes, budget)),
    )(adapt2d, lm_head_t)


# ----------------------------------------------------------------------------
# Pallas kernel 3: causal-LM cross-entropy, tiled over (row tiles, vocab tiles)
# with online max / logsumexp / target-logit accumulators. Row axis "parallel"
# (v7x 2 TensorCores), vocab axis "arbitrary" (reduction). bf16 logits are
# upcast to f32 BEFORE the pad-column -1e30 mask. The HF-style label shift is
# handled outside by pre-shifted targets + a validity mask.
# ----------------------------------------------------------------------------
def _ce_row_kernel(logits_ref, tgt_ref, loss_ref, m_sc, l_sc, t_sc, *, v_true, tv):
    j = pl.program_id(1)

    @pl.when(j == 0)
    def _():
        m_sc[...] = jnp.full_like(m_sc, -1e30)
        l_sc[...] = jnp.zeros_like(l_sc)
        t_sc[...] = jnp.zeros_like(t_sc)

    logits = logits_ref[...].astype(jnp.float32)                         # (tm, tv)
    col = j * tv + jax.lax.broadcasted_iota(jnp.int32, logits.shape, 1)
    logits = jnp.where(col < v_true, logits, -1e30)                      # mask pad cols
    tgt = tgt_ref[...]                                                   # (tm, 1) int32

    m_new = jnp.maximum(m_sc[...], jnp.max(logits, axis=-1, keepdims=True))
    l_sc[...] = (l_sc[...] * jnp.exp(m_sc[...] - m_new)
                 + jnp.sum(jnp.exp(logits - m_new), axis=-1, keepdims=True))
    m_sc[...] = m_new
    t_sc[...] = t_sc[...] + jnp.sum(jnp.where(col == tgt, logits, 0.0),
                                    axis=-1, keepdims=True)

    @pl.when(j == pl.num_programs(1) - 1)
    def _():
        loss_ref[...] = m_sc[...] + jnp.log(l_sc[...]) - t_sc[...]       # per-row CE


def lm_loss(logits2d, shifted_targets, valid, *, v_true, tm, tv, budget):
    Mp, Vp = logits2d.shape
    block_bytes = tm * tv * 2 + tm * 4 + tm * 4 + 3 * tm * 4
    kernel = functools.partial(_ce_row_kernel, v_true=v_true, tv=tv)
    per_row = pl.pallas_call(
        kernel,
        out_shape=jax.ShapeDtypeStruct((Mp, 1), jnp.float32),
        grid=(Mp // tm, Vp // tv),
        in_specs=[
            pl.BlockSpec((tm, tv), lambda i, j: (i, j)),
            pl.BlockSpec((tm, 1), lambda i, j: (i, 0)),
        ],
        out_specs=pl.BlockSpec((tm, 1), lambda i, j: (i, 0)),
        scratch_shapes=[pltpu.VMEM((tm, 1), jnp.float32),
                        pltpu.VMEM((tm, 1), jnp.float32),
                        pltpu.VMEM((tm, 1), jnp.float32)],
        compiler_params=pltpu.CompilerParams(
            dimension_semantics=("parallel", "arbitrary"),
            vmem_limit_bytes=_vmem_limit(block_bytes, budget)),
    )(logits2d, shifted_targets)
    # HF labels=input_ids => mean over the B*(S-1) shifted positions
    M = valid.shape[0]
    return jnp.sum(per_row[:M, 0] * valid) / jnp.maximum(jnp.sum(valid), 1.0)


# ----------------------------------------------------------------------------
# Frozen GPT-2-style backbone (plain JAX glue; stands in for the frozen,
# no-grad pretrained DialoGPT transformer).
# ----------------------------------------------------------------------------
def _layer_norm(x, g, b, eps=1e-5):
    mu = jnp.mean(x, axis=-1, keepdims=True)
    var = jnp.mean((x - mu) ** 2, axis=-1, keepdims=True)
    return (x - mu) * jax.lax.rsqrt(var + eps) * g + b


def gpt2_backbone(params, input_ids, attention_mask, *, n_head):
    B, S = input_ids.shape
    D = params["wte"].shape[1]
    hd = D // n_head
    x = params["wte"][input_ids] + params["wpe"][:S][None, :, :]
    causal = jnp.where(jnp.tril(jnp.ones((S, S), jnp.bool_)), 0.0, -1e9)[None, None]
    pad = (1.0 - attention_mask.astype(jnp.float32))[:, None, None, :] * -1e9
    mask = causal + pad
    for p in params["blocks"]:
        h = _layer_norm(x, p["ln1_g"], p["ln1_b"])
        qkv = h @ p["attn_w"] + p["attn_b"]
        q, k, v = jnp.split(qkv, 3, axis=-1)
        q = q.reshape(B, S, n_head, hd).transpose(0, 2, 1, 3)
        k = k.reshape(B, S, n_head, hd).transpose(0, 2, 1, 3)
        v = v.reshape(B, S, n_head, hd).transpose(0, 2, 1, 3)
        att = jnp.einsum("bhqd,bhkd->bhqk", q, k) / jnp.sqrt(float(hd))
        att = jax.nn.softmax(att + mask, axis=-1)
        o = jnp.einsum("bhqk,bhkd->bhqd", att, v).transpose(0, 2, 1, 3).reshape(B, S, D)
        x = x + o @ p["proj_w"] + p["proj_b"]
        h = _layer_norm(x, p["ln2_g"], p["ln2_b"])
        h = jax.nn.gelu(h @ p["fc_w"] + p["fc_b"], approximate=True)
        x = x + h @ p["fc2_w"] + p["fc2_b"]
    return _layer_norm(x, params["lnf_g"], params["lnf_b"])


# ----------------------------------------------------------------------------
# Parameter init (deterministic, synthetic) and full forward
# ----------------------------------------------------------------------------
def init_params(key, *, vocab, d_model, n_layer, max_pos, emb_dim,
                num_switches, rank, init_var):
    keys = list(jax.random.split(key, 8 + 6 * n_layer))
    it = iter(keys)

    def nrm(shape, std):
        return std * jax.random.normal(next(it), shape, jnp.float32)

    params = {
        "wte": nrm((vocab, d_model), 0.02),
        "wpe": nrm((max_pos, d_model), 0.01),
        "lnf_g": jnp.ones((d_model,), jnp.float32),
        "lnf_b": jnp.zeros((d_model,), jnp.float32),
    }
    blocks = []
    for _ in range(n_layer):
        blocks.append(dict(
            ln1_g=jnp.ones((d_model,), jnp.float32),
            ln1_b=jnp.zeros((d_model,), jnp.float32),
            attn_w=nrm((d_model, 3 * d_model), 0.02),
            attn_b=jnp.zeros((3 * d_model,), jnp.float32),
            proj_w=nrm((d_model, d_model), 0.02),
            proj_b=jnp.zeros((d_model,), jnp.float32),
            ln2_g=jnp.ones((d_model,), jnp.float32),
            ln2_b=jnp.zeros((d_model,), jnp.float32),
            fc_w=nrm((d_model, 4 * d_model), 0.02),
            fc_b=jnp.zeros((4 * d_model,), jnp.float32),
            fc2_w=nrm((4 * d_model, d_model), 0.02),
            fc2_b=jnp.zeros((d_model,), jnp.float32),
        ))
    params["blocks"] = blocks
    params["lm_head"] = params["wte"]                                    # tied (V, D)

    # frozen/tied LM-head weight prepped ONCE (hoisted out of the per-step forward):
    # transpose to (D, V), pad vocab to a tile multiple, cast to bf16.
    tv, Vp = _choose_vocab_tile(vocab, d_model, _vmem_budget())
    params["lm_head_t"] = jnp.pad(params["lm_head"].T,
                                  ((0, 0), (0, Vp - vocab))).astype(jnp.bfloat16)

    # switch_layer: Linear(E,E) -> LeakyReLU -> Linear(E,K), normal(0, 0.01) init
    params["sw_w1"] = nrm((emb_dim, emb_dim), 0.01)                      # stored [in,out]
    params["sw_b1"] = nrm((1, emb_dim), 0.01)
    params["sw_w2"] = nrm((emb_dim, num_switches), 0.01)
    params["sw_b2"] = nrm((1, num_switches), 0.01)
    # Projected_Adaptor projectors: randn(K, D, R) * init_var
    params["proj1"] = nrm((num_switches, d_model, rank), 1.0) * init_var
    params["proj2"] = nrm((num_switches, d_model, rank), 1.0) * init_var
    return params


def switching_dialogpt_forward(params, input_ids, attention_mask, embeddings,
                               *, epsilon, n_head):
    input_ids = input_ids.astype(jnp.int32)
    B, S = input_ids.shape
    D = params["wte"].shape[1]
    V = params["lm_head"].shape[0]
    K, _, R = params["proj1"].shape
    M = B * S
    KR = K * R
    KRp = _round_up(KR, 128)
    budget = _vmem_budget()

    # switch_values = tanh(switch_layer(embeddings)) -- tiny, plain jnp (perf review:
    # pallas launch + DMA overhead exceeds a (B,32)x(32,32) MLP's compute)
    h = embeddings @ params["sw_w1"] + params["sw_b1"]
    h = jnp.where(h > 0, h, 0.01 * h)                                    # LeakyReLU
    sv = jnp.tanh(h @ params["sw_w2"] + params["sw_b2"])                 # (B, K)

    # frozen backbone (plain JAX glue)
    hidden = gpt2_backbone(params, input_ids, attention_mask, n_head=n_head)

    # flatten low-rank projectors + per-batch switch scales (tiny glue, no (M,KRp))
    p1f = jnp.transpose(params["proj1"], (1, 0, 2)).reshape(D, KR)       # (D, K*R)
    p2f = jnp.transpose(params["proj2"], (0, 2, 1)).reshape(KR, D)       # (K*R, D)
    p1f = jnp.pad(p1f, ((0, 0), (0, KRp - KR)))
    p2f = jnp.pad(p2f, ((0, KRp - KR), (0, 0)))
    svr3 = jnp.pad(jnp.repeat(sv.astype(jnp.float32), R, axis=1),
                   ((0, 0), (0, KRp - KR))).reshape(B, 1, KRp)           # (B, 1, KRp)

    # Pallas kernel 1: hoisted Projected_Adaptor -> bf16 adapted hidden
    adapt = adapter_precompute(hidden, svr3, p1f, p2f,
                               epsilon=epsilon, budget=budget)           # (B,S,D) bf16

    # generation-aware tiling (same tv/Vp choice used at init for the weight prep)
    tv, Vp = _choose_vocab_tile(V, D, budget)
    assert params["lm_head_t"].shape == (D, Vp)
    tm, Mp = _choose_row_tile(M)

    adapt2d = adapt.reshape(M, D)
    if Mp != M:                                     # padded (masked) rows, never tm=M
        adapt2d = jnp.pad(adapt2d, ((0, Mp - M), (0, 0)))

    # Pallas kernel 2: logits = adapt @ W_lm^T (bf16 stream, f32 MXU accumulation)
    logits2d = lm_head_matmul(adapt2d, params["lm_head_t"],
                              tm=tm, tv=tv, budget=budget)               # (Mp, Vp) bf16

    # labels = input_ids, HF-style shift via pre-shifted targets + validity mask
    tgt = jnp.concatenate([input_ids[:, 1:], jnp.zeros((B, 1), jnp.int32)],
                          axis=1).reshape(M, 1)
    if Mp != M:
        tgt = jnp.pad(tgt, ((0, Mp - M), (0, 0)))
    valid = jnp.concatenate([jnp.ones((B, S - 1), jnp.float32),
                             jnp.zeros((B, 1), jnp.float32)], axis=1).reshape(M)

    # Pallas kernel 3: tiled online-logsumexp cross-entropy
    loss = lm_loss(logits2d, tgt, valid, v_true=V, tm=tm, tv=tv, budget=budget)

    logits = logits2d[:M, :V].reshape(B, S, V)      # bf16 (see notes on precision)
    return {"loss": loss, "logits": logits, "switch_values": sv}


if __name__ == "__main__":
    B, S = 2, 8          # batch, sequence
    V, D = 128, 32       # vocab, model hidden (embed_dim)
    E, K, R = 32, 4, 4   # switch embedding_dim, num_switches, rank
    N_HEAD, N_LAYER = 4, 2
    EPSILON, INIT_VAR = 1e-3, 1e-2

    key = jax.random.PRNGKey(0)
    pkey, ikey, ekey = jax.random.split(key, 3)
    params = init_params(pkey, vocab=V, d_model=D, n_layer=N_LAYER, max_pos=32,
                         emb_dim=E, num_switches=K, rank=R, init_var=INIT_VAR)

    input_ids = jax.random.randint(ikey, (B, S), 0, V, dtype=jnp.int32)
    attention_mask = jnp.ones((B, S), dtype=jnp.int32)
    embeddings = jax.random.normal(ekey, (B, E), dtype=jnp.float32)

    fwd = jax.jit(functools.partial(switching_dialogpt_forward,
                                    epsilon=EPSILON, n_head=N_HEAD))
    out = fwd(params, input_ids, attention_mask, embeddings)
    jax.block_until_ready(out)
    assert out["logits"].shape == (B, S, V)
    assert out["loss"].shape == ()
    assert out["switch_values"].shape == (B, K)
    assert bool(jnp.isfinite(out["loss"]))
    print("KERNEL_OK")
</pallas_src>

<mosaic_0001>
module attributes {stable_mosaic.version = 11 : i64} {
  func.func @_lm_head_kernel(%arg0: i32, %arg1: i32, %arg2: memref<16x32xbf16, #tpu.memory_space<vmem>>, %arg3: memref<32x128xbf16, #tpu.memory_space<vmem>>, %arg4: memref<16x128xbf16, #tpu.memory_space<vmem>>) attributes {dimension_semantics = [#tpu.dimension_semantics<parallel>, #tpu.dimension_semantics<parallel>], iteration_bounds = array<i64: 1, 1>, scalar_prefetch = 0 : i64, scratch_operands = 0 : i64, tpu.core_type = #tpu.core_type<tc>, window_params = [{transform_indices = @transform_0, window_bounds = array<i64: 16, 32>}, {transform_indices = @transform_1, window_bounds = array<i64: 32, 128>}, {transform_indices = @transform_2, window_bounds = array<i64: 16, 128>}]} {
    %c0 = arith.constant 0 : index
    %c0_0 = arith.constant 0 : index
    %0 = vector.load %arg2[%c0, %c0_0] : memref<16x32xbf16, #tpu.memory_space<vmem>>, vector<16x32xbf16>
    %c0_1 = arith.constant 0 : index
    %c0_2 = arith.constant 0 : index
    %1 = vector.load %arg3[%c0_1, %c0_2] : memref<32x128xbf16, #tpu.memory_space<vmem>>, vector<32x128xbf16>
    %cst = arith.constant dense<0.000000e+00> : vector<16x128xf32>
    %2 = tpu.matmul %0, %1, %cst {dimension_numbers = #tpu.dot_dimension_numbers<[1], [0], [0], [1], [0, 0, 1, 1], [], []>} : vector<16x32xbf16>, vector<32x128xbf16>, vector<16x128xf32> -> vector<16x128xf32>
    %3 = arith.truncf %2 : vector<16x128xf32> to vector<16x128xbf16>
    %c0_3 = arith.constant 0 : index
    %c0_4 = arith.constant 0 : index
    %4 = vector.load %arg4[%c0_3, %c0_4] : memref<16x128xbf16, #tpu.memory_space<vmem>>, vector<16x128xbf16>
    tpu.vector_store %arg4[%c0_3, %c0_4], %3 {strides = array<i32>} : memref<16x128xbf16, #tpu.memory_space<vmem>>, vector<16x128xbf16>,
    return
  }
  func.func @transform_0(%arg0: i32, %arg1: i32) -> (i32, i32) {
    %c0_i32 = arith.constant 0 : i32
    %c0_i32_0 = arith.constant 0 : i32
    return %arg1, %c0_i32 : i32, i32
  }
  func.func @transform_1(%arg0: i32, %arg1: i32) -> (i32, i32) {
    %c0_i32 = arith.constant 0 : i32
    %c0_i32_0 = arith.constant 0 : i32
    return %c0_i32, %arg0 : i32, i32
  }
  func.func @transform_2(%arg0: i32, %arg1: i32) -> (i32, i32) {
    %c0_i32 = arith.constant 0 : i32
    return %arg1, %arg0 : i32, i32
  }
}

module attributes {stable_mosaic.version = 11 : i64} {
  func.func @_adapter_kernel(%arg0: i32, %arg1: memref<1x8x32xf32, #tpu.memory_space<vmem>>, %arg2: memref<1x1x128xf32, #tpu.memory_space<vmem>>, %arg3: memref<32x128xf32, #tpu.memory_space<vmem>>, %arg4: memref<128x32xf32, #tpu.memory_space<vmem>>, %arg5: memref<1x8x32xbf16, #tpu.memory_space<vmem>>) attributes {dimension_semantics = [#tpu.dimension_semantics<parallel>], iteration_bounds = array<i64: 2>, scalar_prefetch = 0 : i64, scratch_operands = 0 : i64, tpu.core_type = #tpu.core_type<tc>, window_params = [{transform_indices = @transform_0, window_bounds = array<i64: 1, 8, 32>}, {transform_indices = @transform_1, window_bounds = array<i64: 1, 1, 128>}, {pipeline_mode = #tpu.pipeline_mode<synchronous>, transform_indices = @transform_2, window_bounds = array<i64: 32, 128>}, {pipeline_mode = #tpu.pipeline_mode<synchronous>, transform_indices = @transform_3, window_bounds = array<i64: 128, 32>}, {transform_indices = @transform_4, window_bounds = array<i64: 1, 8, 32>}]} {
    %c0 = arith.constant 0 : index
    %c0_0 = arith.constant 0 : index
    %c0_1 = arith.constant 0 : index
    %0 = vector.load %arg1[%c0, %c0_0, %c0_1] : memref<1x8x32xf32, #tpu.memory_space<vmem>>, vector<1x8x32xf32>
    %1 = vector.shape_cast %0 : vector<1x8x32xf32> to vector<8x32xf32>
    %c0_2 = arith.constant 0 : index
    %c0_3 = arith.constant 0 : index
    %c0_4 = arith.constant 0 : index
    %2 = vector.load %arg2[%c0_2, %c0_3, %c0_4] : memref<1x1x128xf32, #tpu.memory_space<vmem>>, vector<1x1x128xf32>
    %3 = vector.shape_cast %2 : vector<1x1x128xf32> to vector<1x128xf32>
    %c0_5 = arith.constant 0 : index
    %c0_6 = arith.constant 0 : index
    %4 = vector.load %arg3[%c0_5, %c0_6] : memref<32x128xf32, #tpu.memory_space<vmem>>, vector<32x128xf32>
    %cst = arith.constant dense<0.000000e+00> : vector<8x128xf32>
    %5 = tpu.matmul %1, %4, %cst {dimension_numbers = #tpu.dot_dimension_numbers<[1], [0], [0], [1], [0, 0, 1, 1], [], []>} : vector<8x32xf32>, vector<32x128xf32>, vector<8x128xf32> -> vector<8x128xf32>
    %6 = vector.broadcast %3 : vector<1x128xf32> to vector<8x128xf32>
    %7 = arith.mulf %5, %6 : vector<8x128xf32>
    %c0_7 = arith.constant 0 : index
    %c0_8 = arith.constant 0 : index
    %8 = vector.load %arg4[%c0_7, %c0_8] : memref<128x32xf32, #tpu.memory_space<vmem>>, vector<128x32xf32>
    %cst_9 = arith.constant dense<0.000000e+00> : vector<8x32xf32>
    %9 = tpu.matmul %7, %8, %cst_9 {dimension_numbers = #tpu.dot_dimension_numbers<[1], [0], [0], [1], [0, 0, 1, 1], [], []>} : vector<8x128xf32>, vector<128x32xf32>, vector<8x32xf32> -> vector<8x32xf32>
    %cst_10 = arith.constant 1.000000e-03 : f32
    %10 = vector.broadcast %cst_10 : f32 to vector<8x32xf32>
    %11 = arith.mulf %10, %9 : vector<8x32xf32>
    %12 = arith.addf %1, %11 : vector<8x32xf32>
    %13 = arith.truncf %12 : vector<8x32xf32> to vector<8x32xbf16>
    %c0_11 = arith.constant 0 : index
    %c0_12 = arith.constant 0 : index
    %c0_13 = arith.constant 0 : index
    %14 = vector.load %arg5[%c0_11, %c0_12, %c0_13] : memref<1x8x32xbf16, #tpu.memory_space<vmem>>, vector<1x8x32xbf16>
    %15 = vector.shape_cast %14 : vector<1x8x32xbf16> to vector<8x32xbf16>
    %16 = vector.shape_cast %13 : vector<8x32xbf16> to vector<1x8x32xbf16>
    tpu.vector_store %arg5[%c0_11, %c0_12, %c0_13], %16 {strides = array<i32>} : memref<1x8x32xbf16, #tpu.memory_space<vmem>>, vector<1x8x32xbf16>,
    return
  }
  func.func @transform_0(%arg0: i32) -> (i32, i32, i32) {
    %c0_i32 = arith.constant 0 : i32
    %c0_i32_0 = arith.constant 0 : i32
    %c0_i32_1 = arith.constant 0 : i32
    return %arg0, %c0_i32, %c0_i32_0 : i32, i32, i32
  }
  func.func @transform_1(%arg0: i32) -> (i32, i32, i32) {
    %c0_i32 = arith.constant 0 : i32
    %c0_i32_0 = arith.constant 0 : i32
    %c0_i32_1 = arith.constant 0 : i32
    return %arg0, %c0_i32, %c0_i32_0 : i32, i32, i32
  }
  func.func @transform_2(%arg0: i32) -> (i32, i32) {
    %c0_i32 = arith.constant 0 : i32
    %c0_i32_0 = arith.constant 0 : i32
    %c0_i32_1 = arith.constant 0 : i32
    return %c0_i32, %c0_i32_0 : i32, i32
  }
  func.func @transform_3(%arg0: i32) -> (i32, i32) {
    %c0_i32 = arith.constant 0 : i32
    %c0_i32_0 = arith.constant 0 : i32
    %c0_i32_1 = arith.constant 0 : i32
    return %c0_i32, %c0_i32_0 : i32, i32
  }
  func.func @transform_4(%arg0: i32) -> (i32, i32, i32) {
    %c0_i32 = arith.constant 0 : i32
    %c0_i32_0 = arith.constant 0 : i32
    %c0_i32_1 = arith.constant 0 : i32
    return %arg0, %c0_i32, %c0_i32_0 : i32, i32, i32
  }
}

module attributes {stable_mosaic.version = 11 : i64} {
  func.func @_ce_row_kernel(%arg0: i32, %arg1: i32, %arg2: memref<16x128xbf16, #tpu.memory_space<vmem>>, %arg3: memref<16x1xi32, #tpu.memory_space<vmem>>, %arg4: memref<16x1xf32, #tpu.memory_space<vmem>>, %arg5: memref<16x1xf32, #tpu.memory_space<vmem>>, %arg6: memref<16x1xf32, #tpu.memory_space<vmem>>, %arg7: memref<16x1xf32, #tpu.memory_space<vmem>>) attributes {dimension_semantics = [#tpu.dimension_semantics<parallel>, #tpu.dimension_semantics<arbitrary>], iteration_bounds = array<i64: 1, 1>, scalar_prefetch = 0 : i64, scratch_operands = 3 : i64, tpu.core_type = #tpu.core_type<tc>, window_params = [{transform_indices = @transform_0, window_bounds = array<i64: 16, 128>}, {transform_indices = @transform_1, window_bounds = array<i64: 16, 1>}, {transform_indices = @transform_2, window_bounds = array<i64: 16, 1>}]} {
    %c0_i32 = arith.constant 0 : i32
    %0 = arith.cmpi eq, %arg1, %c0_i32 : i32
    %1 = arith.extui %0 : i1 to i32
    %c0_i32_0 = arith.constant 0 : i32
    %2 = arith.cmpi ne, %1, %c0_i32_0 : i32
    scf.if %2 {
      %cst_25 = arith.constant -1.000000e+30 : f32
      %43 = vector.broadcast %cst_25 : f32 to vector<16x1xf32>
      %c0_26 = arith.constant 0 : index
      %c0_27 = arith.constant 0 : index
      %44 = vector.load %arg5[%c0_26, %c0_27] : memref<16x1xf32, #tpu.memory_space<vmem>>, vector<16x1xf32>
      tpu.vector_store %arg5[%c0_26, %c0_27], %43 {strides = array<i32>} : memref<16x1xf32, #tpu.memory_space<vmem>>, vector<16x1xf32>,
      %cst_28 = arith.constant 0.000000e+00 : f32
      %45 = vector.broadcast %cst_28 : f32 to vector<16x1xf32>
      %c0_29 = arith.constant 0 : index
      %c0_30 = arith.constant 0 : index
      %46 = vector.load %arg6[%c0_29, %c0_30] : memref<16x1xf32, #tpu.memory_space<vmem>>, vector<16x1xf32>
      tpu.vector_store %arg6[%c0_29, %c0_30], %45 {strides = array<i32>} : memref<16x1xf32, #tpu.memory_space<vmem>>, vector<16x1xf32>,
      %cst_31 = arith.constant 0.000000e+00 : f32
      %47 = vector.broadcast %cst_31 : f32 to vector<16x1xf32>
      %c0_32 = arith.constant 0 : index
      %c0_33 = arith.constant 0 : index
      %48 = vector.load %arg7[%c0_32, %c0_33] : memref<16x1xf32, #tpu.memory_space<vmem>>, vector<16x1xf32>
      tpu.vector_store %arg7[%c0_32, %c0_33], %47 {strides = array<i32>} : memref<16x1xf32, #tpu.memory_space<vmem>>, vector<16x1xf32>,
    } else {
    }
    %c0 = arith.constant 0 : index
    %c0_1 = arith.constant 0 : index
    %3 = vector.load %arg2[%c0, %c0_1] : memref<16x128xbf16, #tpu.memory_space<vmem>>, vector<16x128xbf16>
    %4 = arith.extf %3 : vector<16x128xbf16> to vector<16x128xf32>
    %c128_i32 = arith.constant 128 : i32
    %5 = arith.muli %arg1, %c128_i32 : i32
    %6 = tpu.iota {dimensions = array<i32: 1>} : vector<16x128xi32>
    %7 = vector.broadcast %5 : i32 to vector<16x128xi32>
    %8 = arith.addi %7, %6 : vector<16x128xi32>
    %c128_i32_2 = arith.constant 128 : i32
    %9 = vector.broadcast %c128_i32_2 : i32 to vector<16x128xi32>
    %10 = arith.cmpi slt, %8, %9 : vector<16x128xi32>
    %cst = arith.constant -1.000000e+30 : f32
    %11 = vector.broadcast %cst : f32 to vector<16x128xf32>
    %12 = arith.select %10, %4, %11 : vector<16x128xi1>, vector<16x128xf32>
    %c0_3 = arith.constant 0 : index
    %c0_4 = arith.constant 0 : index
    %13 = vector.load %arg3[%c0_3, %c0_4] : memref<16x1xi32, #tpu.memory_space<vmem>>, vector<16x1xi32>
    %c0_5 = arith.constant 0 : index
    %c0_6 = arith.constant 0 : index
    %14 = vector.load %arg5[%c0_5, %c0_6] : memref<16x1xf32, #tpu.memory_space<vmem>>, vector<16x1xf32>
    %cst_7 = arith.constant dense<0xFF800000> : vector<16xf32>
    %15 = vector.multi_reduction <maximumf>, %12, %cst_7 [1] : vector<16x128xf32> to vector<16xf32>
    %16 = vector.shape_cast %15 : vector<16xf32> to vector<16x1xf32>
    %17 = arith.maximumf %14, %16 : vector<16x1xf32>
    %c0_8 = arith.constant 0 : index
    %c0_9 = arith.constant 0 : index
    %18 = vector.load %arg6[%c0_8, %c0_9] : memref<16x1xf32, #tpu.memory_space<vmem>>, vector<16x1xf32>
    %c0_10 = arith.constant 0 : index
    %c0_11 = arith.constant 0 : index
    %19 = vector.load %arg5[%c0_10, %c0_11] : memref<16x1xf32, #tpu.memory_space<vmem>>, vector<16x1xf32>
    %20 = arith.subf %19, %17 : vector<16x1xf32>
    %21 = math.exp %20 : vector<16x1xf32>
    %22 = arith.mulf %18, %21 : vector<16x1xf32>
    %23 = vector.broadcast %17 : vector<16x1xf32> to vector<16x128xf32>
    %24 = arith.subf %12, %23 : vector<16x128xf32>
    %25 = math.exp %24 : vector<16x128xf32>
    %cst_12 = arith.constant dense<0.000000e+00> : vector<16xf32>
    %26 = vector.multi_reduction <add>, %25, %cst_12 [1] : vector<16x128xf32> to vector<16xf32>
    %27 = vector.shape_cast %26 : vector<16xf32> to vector<16x1xf32>
    %28 = arith.addf %22, %27 : vector<16x1xf32>
    %c0_13 = arith.constant 0 : index
    %c0_14 = arith.constant 0 : index
    %29 = vector.load %arg6[%c0_13, %c0_14] : memref<16x1xf32, #tpu.memory_space<vmem>>, vector<16x1xf32>
    tpu.vector_store %arg6[%c0_13, %c0_14], %28 {strides = array<i32>} : memref<16x1xf32, #tpu.memory_space<vmem>>, vector<16x1xf32>,
    %c0_15 = arith.constant 0 : index
    %c0_16 = arith.constant 0 : index
    %30 = vector.load %arg5[%c0_15, %c0_16] : memref<16x1xf32, #tpu.memory_space<vmem>>, vector<16x1xf32>
    tpu.vector_store %arg5[%c0_15, %c0_16], %17 {strides = array<i32>} : memref<16x1xf32, #tpu.memory_space<vmem>>, vector<16x1xf32>,
    %c0_17 = arith.constant 0 : index
    %c0_18 = arith.constant 0 : index
    %31 = vector.load %arg7[%c0_17, %c0_18] : memref<16x1xf32, #tpu.memory_space<vmem>>, vector<16x1xf32>
    %32 = vector.broadcast %13 : vector<16x1xi32> to vector<16x128xi32>
    %33 = arith.cmpi eq, %8, %32 : vector<16x128xi32>
    %cst_19 = arith.constant 0.000000e+00 : f32
    %34 = vector.broadcast %cst_19 : f32 to vector<16x128xf32>
    %35 = arith.select %33, %12, %34 : vector<16x128xi1>, vector<16x128xf32>
    %cst_20 = arith.constant dense<0.000000e+00> : vector<16xf32>
    %36 = vector.multi_reduction <add>, %35, %cst_20 [1] : vector<16x128xf32> to vector<16xf32>
    %37 = vector.shape_cast %36 : vector<16xf32> to vector<16x1xf32>
    %38 = arith.addf %31, %37 : vector<16x1xf32>
    %c0_21 = arith.constant 0 : index
    %c0_22 = arith.constant 0 : index
    %39 = vector.load %arg7[%c0_21, %c0_22] : memref<16x1xf32, #tpu.memory_space<vmem>>, vector<16x1xf32>
    tpu.vector_store %arg7[%c0_21, %c0_22], %38 {strides = array<i32>} : memref<16x1xf32, #tpu.memory_space<vmem>>, vector<16x1xf32>,
    %c0_i32_23 = arith.constant 0 : i32
    %40 = arith.cmpi eq, %arg1, %c0_i32_23 : i32
    %41 = arith.extui %40 : i1 to i32
    %c0_i32_24 = arith.constant 0 : i32
    %42 = arith.cmpi ne, %41, %c0_i32_24 : i32
    scf.if %42 {
      %c0_25 = arith.constant 0 : index
      %c0_26 = arith.constant 0 : index
      %43 = vector.load %arg5[%c0_25, %c0_26] : memref<16x1xf32, #tpu.memory_space<vmem>>, vector<16x1xf32>
      %c0_27 = arith.constant 0 : index
      %c0_28 = arith.constant 0 : index
      %44 = vector.load %arg6[%c0_27, %c0_28] : memref<16x1xf32, #tpu.memory_space<vmem>>, vector<16x1xf32>
      %45 = math.log %44 : vector<16x1xf32>
      %46 = arith.addf %43, %45 : vector<16x1xf32>
      %c0_29 = arith.constant 0 : index
      %c0_30 = arith.constant 0 : index
      %47 = vector.load %arg7[%c0_29, %c0_30] : memref<16x1xf32, #tpu.memory_space<vmem>>, vector<16x1xf32>
      %48 = arith.subf %46, %47 : vector<16x1xf32>
      %c0_31 = arith.constant 0 : index
      %c0_32 = arith.constant 0 : index
      %49 = vector.load %arg4[%c0_31, %c0_32] : memref<16x1xf32, #tpu.memory_space<vmem>>, vector<16x1xf32>
      tpu.vector_store %arg4[%c0_31, %c0_32], %48 {strides = array<i32>} : memref<16x1xf32, #tpu.memory_space<vmem>>, vector<16x1xf32>,
    } else {
    }
    return
  }
  func.func @transform_0(%arg0: i32, %arg1: i32) -> (i32, i32) {
    %c0_i32 = arith.constant 0 : i32
    return %arg0, %arg1 : i32, i32
  }
  func.func @transform_1(%arg0: i32, %arg1: i32) -> (i32, i32) {
    %c0_i32 = arith.constant 0 : i32
    %c0_i32_0 = arith.constant 0 : i32
    return %arg0, %c0_i32 : i32, i32
  }
  func.func @transform_2(%arg0: i32, %arg1: i32) -> (i32, i32) {
    %c0_i32 = arith.constant 0 : i32
    %c0_i32_0 = arith.constant 0 : i32
    return %arg0, %c0_i32 : i32, i32
  }
}

</mosaic_0001>

<llo_original>
// kernel: switching_dialogpt_forward.4
$region0: #{switching_dialogpt_forward.4}
  #allocation0 [shape = 'u32[]', space=smem, size = 0x4, offset = 0x4, fixed_abs, tag = 'smem constant byte address 0x4 - core index']
  #allocation1 [shape = 'u32[72,128]{1,0:T(1,128)}', space=vmem, size = 0x9000, scoped, tag = 'internal scratch']
  %s0 = inlined_call_operand.vmem [shape: bf16[16,32], index: 0, kind: input, shape index: {}]
  %s1 = inlined_call_operand.vmem [shape: bf16[32,128], index: 1, kind: input, shape index: {}]
  %s2 = inlined_call_operand.vmem [shape: bf16[16,128], index: 2, kind: output, shape index: {}]
  %s3 = sld [smem:[#allocation0]]
  $region18: #{switching_dialogpt_forward.4} parent=0
    _
  %s5 = ssub.s32 1, %s3
  %s6 = scalar_select 0, %s5, %s3
  // Predicated region
  $region2: #{switching_dialogpt_forward.4} parent=0 // pred_check
    _
  $region3: #{switching_dialogpt_forward.4} parent=0 // pred_check_branch
    %8 = sbr.rel (0) target = $region5
  $region4: #{switching_dialogpt_forward.4} parent=0 // pred_region
    _
  $region5: #{switching_dialogpt_forward.4} parent=0 // pred_fallthru
    _
  // Predicated region
  $region6: #{switching_dialogpt_forward.4} parent=0 // pred_check
    _
  $region7: #{switching_dialogpt_forward.4} parent=0 // pred_check_branch
    %10 = sbr.rel (0) target = $region9
  $region8: #{switching_dialogpt_forward.4} parent=0 // pred_region
    _
  $region9: #{switching_dialogpt_forward.4} parent=0 // pred_fallthru
    _
  %v12 = vld [vmem:[%s0] sm:$0xf]
  %v13 = vld [vmem:[%s0 + $0x4] sm:$0xf]
  %v14 = vld [vmem:[%s1] sm:$0xf]
  %v15 = vld [vmem:[%s1 + $0x4] sm:$0xf]
  %v16 = vld [vmem:[%s1 + $0x8] sm:$0xf]
  %v17 = vld [vmem:[%s1 + $0xc] sm:$0xf]
  %v20 = vunpack.c.l.b16 %v12
  %v21 = vunpack.c.l.b16 %v13
  %v22 = vpack.c.b16 %v21, %v20
  %v27 = vunpack.c.l.b16 %v14
  %v28 = vunpack.c.l.b16 %v15
  %v29 = vunpack.c.l.b16 %v16
  %v30 = vunpack.c.l.b16 %v17
  %v31 = vpack.c.b16 %v28, %v27
  %v32 = vpack.c.b16 %v30, %v29
  %vm35 = vcmask 261120
  %v37 = vsel %vm35, %v22, 0
  %39 = vmatpush.bf16.msra.mxu0 0
  %40 = vmatpush.bf16.msra.mxu0 0
  %41 = vmatpush.bf16.msra.mxu0 0
  %42 = vmatpush.bf16.msra.mxu0 0
  %43 = vmatpush.bf16.msra.mxu0 0
  %44 = vmatpush.bf16.msra.mxu0 0
  %45 = vmatpush.bf16.msra.mxu0 %v32
  %46 = vmatpush.bf16.msra.mxu0 %v31
  %47 = vmatmul.bf16.gmra.mxu0 %v37
  %v48 = vpop.f32.mrf.mxu0
  %v49 = vadd.f32 0.0, %v48
  %v50 = vpop.f32.mrf.mxu0
  %v51 = vadd.f32 0.0, %v50
  %52 = vdwg.mxu0
  %v53 = vpack.c.bf16 %v49, %v49
  %v54 = vpack.c.bf16 %v51, %v51
  %55 = vst [vmem:[%s2] sm:$0xf] %v53
  %56 = vst [vmem:[%s2 + $0x4] sm:$0xf] %v54
  // Predicated region
  $region10: #{switching_dialogpt_forward.4} parent=0 // pred_check
    _
  $region11: #{switching_dialogpt_forward.4} parent=0 // pred_check_branch
    %58 = sbr.rel (0) target = $region13
  $region12: #{switching_dialogpt_forward.4} parent=0 // pred_region
    _
  $region13: #{switching_dialogpt_forward.4} parent=0 // pred_fallthru
    _
  // Predicated region
  $region14: #{switching_dialogpt_forward.4} parent=0 // pred_check
    _
  $region15: #{switching_dialogpt_forward.4} parent=0 // pred_check_branch
    %60 = sbr.rel (0) target = $region17
  $region16: #{switching_dialogpt_forward.4} parent=0 // pred_region
    _
  $region17: #{switching_dialogpt_forward.4} parent=0 // pred_fallthru
    _

// kernel: switching_dialogpt_forward.3
$region0: #{switching_dialogpt_forward.3}
  #allocation0 [shape = 'u32[]', space=smem, size = 0x4, offset = 0x4, fixed_abs, tag = 'smem constant byte address 0x4 - core index']
  #allocation1 [shape = 'u32[72,128]{1,0:T(1,128)}', space=vmem, size = 0x9000, scoped, tag = 'internal scratch']
  %s0 = inlined_call_operand.vmem [shape: f32[2,8,32], index: 0, kind: input, shape index: {}]
  %s1 = inlined_call_operand.vmem [shape: f32[2,1,128], index: 1, kind: input, shape index: {}]
  %s2 = inlined_call_operand.vmem [shape: f32[32,128], index: 2, kind: input, shape index: {}]
  %s3 = inlined_call_operand.vmem [shape: f32[128,32], index: 3, kind: input, shape index: {}]
  %s4 = inlined_call_operand.vmem [shape: bf16[2,8,32], index: 4, kind: output, shape index: {}]
  %s5 = sld [smem:[#allocation0]]
  $region49: #{switching_dialogpt_forward.3} parent=0
    _
  %s7 = ssub.s32 1, %s5
  %s8 = scalar_select 0, %s7, %s5
  loop: start=0, step=1, limit=4
  $region2: #{switching_dialogpt_forward.3} parent=0 // loop_pre_header
    _
  $region3: #{switching_dialogpt_forward.3} parent=0 // loop_header
    %s10 = sphi 0, %s14
    %p11 = scmp.ge.s32.totalorder %s10, 4
    %s20 = sphi 0, %s22
    %s23 = sphi 0, %s20
    %s24 = sphi 0, %s23
    %s40 = sphi 0, %s24
    %s46 = sphi 0, %s48
    %s49 = sphi 0, %s46
    %s50 = sphi 0, %s49
    %s66 = sphi 0, %s50
    %s70 = sphi 0, %s70
    %s72 = sphi 0, %s70
    %s73 = sphi 0, %s72
    %s87 = sphi 0, %s73
    %s91 = sphi 0, %s91
    %s93 = sphi 0, %s91
    %s94 = sphi 0, %s93
    %s108 = sphi 0, %s94
    %s114 = sphi 0, %s116
    %s117 = sphi 0, %s114
    %s118 = sphi 0, %s117
    %s134 = sphi 0, %s118
  $region4: #{switching_dialogpt_forward.3} parent=0 // loop_header_branch
    %13 = sbr.rel (%p11) target = $region8
  $region5: #{switching_dialogpt_forward.3} parent=0 // loop_body
    %s15 = ssub.s32 %s10, 1
    %s16 = ssub.s32 %s10, 2
    %s17 = sadd.s32 %s10, 1
    %s18 = ssub.s32 %s10, %s17
    %p19 = scmp.eq.s32.totalorder %s18, 0
    %s21 = sadd.s32 %s20, 1
    %s22 = scalar_select %p19, %s20, %s21
    %p25 = pneg %p19
    %p26 = scmp.eq.s32.totalorder %s10, 1
    %p27 = por %p25, %p26
    %p28 = scmp.ne.s32.totalorder %s20, %s23
    %p29 = scmp.eq.s32.totalorder %s10, 0
    %p30 = por %p28, %p29
    %p31 = scmp.ne.s32.totalorder %s20, %s23
    %p32 = scmp.eq.s32.totalorder %s15, 1
    %p33 = por %p31, %p32
    %p34 = scmp.ne.s32.totalorder %s23, %s24
    %p35 = scmp.eq.s32.totalorder %s15, 0
    %p36 = por %p34, %p35
    %p37 = scmp.ne.s32.totalorder %s23, %s24
    %p38 = scmp.eq.s32.totalorder %s16, 1
    %p39 = por %p37, %p38
    %p41 = scmp.ne.s32.totalorder %s24, %s40
    %p42 = scmp.eq.s32.totalorder %s16, 0
    %p43 = por %p41, %p42
    %s44 = ssub.s32 %s10, %s17
    %p45 = scmp.eq.s32.totalorder %s44, 0
    %s47 = sadd.s32 %s46, 1
    %s48 = scalar_select %p45, %s46, %s47
    %p51 = pneg %p45
    %p52 = scmp.eq.s32.totalorder %s10, 1
    %p53 = por %p51, %p52
    %p54 = scmp.ne.s32.totalorder %s46, %s49
    %p55 = scmp.eq.s32.totalorder %s10, 0
    %p56 = por %p54, %p55
    %p57 = scmp.ne.s32.totalorder %s46, %s49
    %p58 = scmp.eq.s32.totalorder %s15, 1
    %p59 = por %p57, %p58
    %p60 = scmp.ne.s32.totalorder %s49, %s50
    %p61 = scmp.eq.s32.totalorder %s15, 0
    %p62 = por %p60, %p61
    %p63 = scmp.ne.s32.totalorder %s49, %s50
    %p64 = scmp.eq.s32.totalorder %s16, 1
    %p65 = por %p63, %p64
    %p67 = scmp.ne.s32.totalorder %s50, %s66
    %p68 = scmp.eq.s32.totalorder %s16, 0
    %p69 = por %p67, %p68
    %s71 = sadd.s32 %s70, 1
    %p74 = scmp.eq.s32.totalorder %s10, 1
    %p75 = scmp.ne.s32.totalorder %s70, %s72
    %p76 = scmp.eq.s32.totalorder %s10, 0
    %p77 = por %p75, %p76
    %p78 = scmp.ne.s32.totalorder %s70, %s72
    %p79 = scmp.eq.s32.totalorder %s15, 1
    %p80 = por %p78, %p79
    %p81 = scmp.ne.s32.totalorder %s72, %s73
    %p82 = scmp.eq.s32.totalorder %s15, 0
    %p83 = por %p81, %p82
    %p84 = scmp.ne.s32.totalorder %s72, %s73
    %p85 = scmp.eq.s32.totalorder %s16, 1
    %p86 = por %p84, %p85
    %p88 = scmp.ne.s32.totalorder %s73, %s87
    %p89 = scmp.eq.s32.totalorder %s16, 0
    %p90 = por %p88, %p89
    %s92 = sadd.s32 %s91, 1
    %p95 = scmp.eq.s32.totalorder %s10, 1
    %p96 = scmp.ne.s32.totalorder %s91, %s93
    %p97 = scmp.eq.s32.totalorder %s10, 0
    %p98 = por %p96, %p97
    %p99 = scmp.ne.s32.totalorder %s91, %s93
    %p100 = scmp.eq.s32.totalorder %s15, 1
    %p101 = por %p99, %p100
    %p102 = scmp.ne.s32.totalorder %s93, %s94
    %p103 = scmp.eq.s32.totalorder %s15, 0
    %p104 = por %p102, %p103
    %p105 = scmp.ne.s32.totalorder %s93, %s94
    %p106 = scmp.eq.s32.totalorder %s16, 1
    %p107 = por %p105, %p106
    %p109 = scmp.ne.s32.totalorder %s94, %s108
    %p110 = scmp.eq.s32.totalorder %s16, 0
    %p111 = por %p109, %p110
    %s112 = ssub.s32 %s10, %s17
    %p113 = scmp.eq.s32.totalorder %s112, 0
    %s115 = sadd.s32 %s114, 1
    %s116 = scalar_select %p113, %s114, %s115
    %p119 = pneg %p113
    %p120 = scmp.eq.s32.totalorder %s10, 1
    %p121 = por %p119, %p120
    %p122 = scmp.ne.s32.totalorder %s114, %s117
    %p123 = scmp.eq.s32.totalorder %s10, 0
    %p124 = por %p122, %p123
    %p125 = scmp.ne.s32.totalorder %s114, %s117
    %p126 = scmp.eq.s32.totalorder %s15, 1
    %p127 = por %p125, %p126
    %p128 = scmp.ne.s32.totalorder %s117, %s118
    %p129 = scmp.eq.s32.totalorder %s15, 0
    %p130 = por %p128, %p129
    %p131 = scmp.ne.s32.totalorder %s117, %s118
    %p132 = scmp.eq.s32.totalorder %s16, 1
    %p133 = por %p131, %p132
    %p135 = scmp.ne.s32.totalorder %s118, %s134
    %p136 = scmp.eq.s32.totalorder %s16, 0
    %p137 = por %p135, %p136
    %p138 = scmp.le.s32.totalorder 1, %s10
    %p139 = scmp.lt.s32.totalorder %s10, 3
    %p140 = pnand %p138, %p139
    %p141 = pneg %p140
    // Predicated region
    $region9: #{switching_dialogpt_forward.3} parent=5 // pred_check
      _
    $region10: #{switching_dialogpt_forward.3} parent=5 // pred_check_branch
      %143 = sbr.rel (%p140) target = $region12
    $region11: #{switching_dialogpt_forward.3} parent=5 // pred_region
      %s144 = ssub.s32 %s10, 1
      // Predicated region
      $region13: #{switching_dialogpt_forward.3} parent=11 // pred_check
        %p145 = pneg %p83
      $region14: #{switching_dialogpt_forward.3} parent=11 // pred_check_branch
        %147 = sbr.rel (%p145) target = $region16
      $region15: #{switching_dialogpt_forward.3} parent=11 // pred_region
        _
      $region16: #{switching_dialogpt_forward.3} parent=11 // pred_fallthru
        _
      // Predicated region
      $region17: #{switching_dialogpt_forward.3} parent=11 // pred_check
        %p148 = pneg %p104
      $region18: #{switching_dialogpt_forward.3} parent=11 // pred_check_branch
        %150 = sbr.rel (%p148) target = $region20
      $region19: #{switching_dialogpt_forward.3} parent=11 // pred_region
        _
      $region20: #{switching_dialogpt_forward.3} parent=11 // pred_fallthru
        _
    $region12: #{switching_dialogpt_forward.3} parent=5 // pred_fallthru
      _
    %p151 = scmp.lt.s32.totalorder %s10, 2
    // Predicated region
    $region21: #{switching_dialogpt_forward.3} parent=5 // pred_check
      %p152 = pneg %p151
    $region22: #{switching_dialogpt_forward.3} parent=5 // pred_check_branch
      %154 = sbr.rel (%p152) target = $region24
    $region23: #{switching_dialogpt_forward.3} parent=5 // pred_region
      // Predicated region
      $region25: #{switching_dialogpt_forward.3} parent=23 // pred_check
        %p155 = pneg %p30
      $region26: #{switching_dialogpt_forward.3} parent=23 // pred_check_branch
        %157 = sbr.rel (%p155) target = $region28
      $region27: #{switching_dialogpt_forward.3} parent=23 // pred_region
        %p158 = scmp.lt.s32.totalorder %s10, 1
        %s159 = scalar_select %p158, %s10, 1
        %s160 = smul.addr %s159, 8
        %s161 = scalar_lea.vmem %s0, %s160
      $region28: #{switching_dialogpt_forward.3} parent=23 // pred_fallthru
        _
      // Predicated region
      $region29: #{switching_dialogpt_forward.3} parent=23 // pred_check
        %p162 = pneg %p56
      $region30: #{switching_dialogpt_forward.3} parent=23 // pred_check_branch
        %164 = sbr.rel (%p162) target = $region32
      $region31: #{switching_dialogpt_forward.3} parent=23 // pred_region
        %p165 = scmp.lt.s32.totalorder %s10, 1
        %s166 = scalar_select %p165, %s10, 1
        %s167 = scalar_lea.vmem %s1, %s166
      $region32: #{switching_dialogpt_forward.3} parent=23 // pred_fallthru
        _
    $region24: #{switching_dialogpt_forward.3} parent=5 // pred_fallthru
      _
    %p168 = scmp.le.s32.totalorder 1, %s10
    %p169 = scmp.lt.s32.totalorder %s10, 3
    %p170 = pnand %p168, %p169
    %p171 = pneg %p170
    // Predicated region
    $region33: #{switching_dialogpt_forward.3} parent=5 // pred_check
      _
    $region34: #{switching_dialogpt_forward.3} parent=5 // pred_check_branch
      %173 = sbr.rel (%p170) target = $region36
    $region35: #{switching_dialogpt_forward.3} parent=5 // pred_region
      %s174 = ssub.s32 %s10, 1
      %p175 = scmp.lt.s32.totalorder %s15, 1
      %s176 = scalar_select %p175, %s15, 1
      %s177 = smul.addr %s176, 8
      %s178 = scalar_lea.vmem %s0, %s177
      %p179 = pneg %p36
      %p180 = pneg %p33
      %p181 = scmp.lt.s32.totalorder %s15, 1
      %s182 = scalar_select %p181, %s15, 1
      %s183 = scalar_lea.vmem %s1, %s182
      %p184 = pneg %p62
      %p185 = pneg %p59
      %p186 = pneg %p83
      %p187 = pneg %p80
      %p188 = pneg %p104
      %p189 = pneg %p101
      %p190 = pneg %p130
      %p191 = pneg %p127
      %p192 = scmp.lt.s32.totalorder %s15, 1
      %s193 = scalar_select %p192, %s15, 1
      %s194 = smul.addr %s193, 4
      %s195 = scalar_lea.vmem %s4, %s194
      %p196 = scmp.lt.s32.totalorder %s15, 1
      %s197 = scalar_select %p196, %s15, 1
      %s198 = smul.addr %s197, 8
      %s199 = scalar_lea.vmem %s0, %s198
      %p200 = scmp.lt.s32.totalorder %s15, 1
      %s201 = scalar_select %p200, %s15, 1
      %s202 = scalar_lea.vmem %s1, %s201
      %p203 = scmp.lt.s32.totalorder %s15, 1
      %s204 = scalar_select %p203, %s15, 1
      %s205 = smul.addr %s204, 4
      %s206 = scalar_lea.vmem %s4, %s205
      %v207 = vld [vmem:[%s199] sm:$0xff]
      %v208 = vld [vmem:[%s202] sm:$0x1]
      %v209 = vld [vmem:[%s2] sm:$0xff]
      %v210 = vld [vmem:[%s2 + $0x8] sm:$0xff]
      %v211 = vld [vmem:[%s2 + $0x10] sm:$0xff]
      %v212 = vld [vmem:[%s2 + $0x18] sm:$0xff]
      %vm213 = vcmask 261120
      %v215 = vsel %vm213, %v207, 0
      %217 = vmatpush.msra.mxu0 0.0
      %218 = vmatpush.msra.mxu0 0.0
      %219 = vmatpush.msra.mxu0 0.0
      %220 = vmatpush.msra.mxu0 0.0
      %221 = vmatpush.msra.mxu0 0.0
      %222 = vmatpush.msra.mxu0 0.0
      %223 = vmatpush.msra.mxu0 0.0
      %224 = vmatpush.msra.mxu0 0.0
      %225 = vmatpush.msra.mxu0 0.0
      %226 = vmatpush.msra.mxu0 0.0
      %227 = vmatpush.msra.mxu0 0.0
      %228 = vmatpush.msra.mxu0 0.0
      %229 = vmatpush.msra.mxu0 %v212
      %230 = vmatpush.msra.mxu0 %v211
      %231 = vmatpush.msra.mxu0 %v210
      %232 = vmatpush.msra.mxu0 %v209
      %233 = vmatmul.f32.gmra.mxu0 %v215
      %v234 = vpop.f32.mrf.mxu0
      %v235 = vadd.f32 0.0, %v234
      %236 = vdwg.mxu0
      %v238 = vperm.slane %v208, 0
      %v240 = vmul.f32 %v235, %v238
      %v241 = vld [vmem:[%s3] sm:$0xff]
      %v242 = vld [vmem:[%s3 + $0x8] sm:$0xff]
      %v243 = vld [vmem:[%s3 + $0x10] sm:$0xff]
      %v244 = vld [vmem:[%s3 + $0x18] sm:$0xff]
      %v245 = vld [vmem:[%s3 + $0x20] sm:$0xff]
      %v246 = vld [vmem:[%s3 + $0x28] sm:$0xff]
      %v247 = vld [vmem:[%s3 + $0x30] sm:$0xff]
      %v248 = vld [vmem:[%s3 + $0x38] sm:$0xff]
      %v249 = vld [vmem:[%s3 + $0x40] sm:$0xff]
      %v250 = vld [vmem:[%s3 + $0x48] sm:$0xff]
      %v251 = vld [vmem:[%s3 + $0x50] sm:$0xff]
      %v252 = vld [vmem:[%s3 + $0x58] sm:$0xff]
      %v253 = vld [vmem:[%s3 + $0x60] sm:$0xff]
      %v254 = vld [vmem:[%s3 + $0x68] sm:$0xff]
      %v255 = vld [vmem:[%s3 + $0x70] sm:$0xff]
      %v256 = vld [vmem:[%s3 + $0x78] sm:$0xff]
      %257 = vmatpush.msra.mxu0 %v256
      %258 = vmatpush.msra.mxu0 %v255
      %259 = vmatpush.msra.mxu0 %v254
      %260 = vmatpush.msra.mxu0 %v253
      %261 = vmatpush.msra.mxu0 %v252
      %262 = vmatpush.msra.mxu0 %v251
      %263 = vmatpush.msra.mxu0 %v250
      %264 = vmatpush.msra.mxu0 %v249
      %265 = vmatpush.msra.mxu0 %v248
      %266 = vmatpush.msra.mxu0 %v247
      %267 = vmatpush.msra.mxu0 %v246
      %268 = vmatpush.msra.mxu0 %v245
      %269 = vmatpush.msra.mxu0 %v244
      %270 = vmatpush.msra.mxu0 %v243
      %271 = vmatpush.msra.mxu0 %v242
      %272 = vmatpush.msra.mxu0 %v241
      %273 = vmatmul.f32.gmra.mxu0 %v240
      %v274 = vpop.f32.mrf.mxu0
      %v275 = vadd.f32 0.0, %v274
      %276 = vdwg.mxu0
      %v277 = vmul.f32 %v275, 0.001
      %v278 = vadd.f32 %v207, %v277
      %v279 = vpack.c.bf16 %v278, %v278
      %vm280 = vcmask 257024
      %281 = vst.msk [vmem:[%s206] sm:$0xf] %vm280, %v279
      %p282 = scmp.lt.s32.totalorder %s15, 1
      %s283 = scalar_select %p282, %s15, 1
      %s284 = smul.addr %s283, 4
      %s285 = scalar_lea.vmem %s4, %s284
      // Predicated region
      $region37: #{switching_dialogpt_forward.3} parent=35 // pred_check
        %p286 = pneg %p127
      $region38: #{switching_dialogpt_forward.3} parent=35 // pred_check_branch
        %288 = sbr.rel (%p286) target = $region40
      $region39: #{switching_dialogpt_forward.3} parent=35 // pred_region
        _
      $region40: #{switching_dialogpt_forward.3} parent=35 // pred_fallthru
        _
    $region36: #{switching_dialogpt_forward.3} parent=5 // pred_fallthru
      _
    %p289 = scmp.le.s32.totalorder 2, %s10
    // Predicated region
    $region41: #{switching_dialogpt_forward.3} parent=5 // pred_check
      %p290 = pneg %p289
    $region42: #{switching_dialogpt_forward.3} parent=5 // pred_check_branch
      %292 = sbr.rel (%p290) target = $region44
    $region43: #{switching_dialogpt_forward.3} parent=5 // pred_region
      %s293 = ssub.s32 %s10, 2
      // Predicated region
      $region45: #{switching_dialogpt_forward.3} parent=43 // pred_check
        %p294 = pneg %p133
      $region46: #{switching_dialogpt_forward.3} parent=43 // pred_check_branch
        %296 = sbr.rel (%p294) target = $region48
      $region47: #{switching_dialogpt_forward.3} parent=43 // pred_region
        %p297 = scmp.lt.s32.totalorder %s16, 1
        %s298 = scalar_select %p297, %s16, 1
        %s299 = smul.addr %s298, 4
        %s300 = scalar_lea.vmem %s4, %s299
      $region48: #{switching_dialogpt_forward.3} parent=43 // pred_fallthru
        _
    $region44: #{switching_dialogpt_forward.3} parent=5 // pred_fallthru
      _
  $region6: #{switching_dialogpt_forward.3} parent=0 // loop_footer
    %s14 = sadd.s32 1, %s10
  $region7: #{switching_dialogpt_forward.3} parent=0 // loop_footer_branch
    %9 = sbr.rel target = $region3
  $region8: #{switching_dialogpt_forward.3} parent=0 // loop_exit
    _

// kernel: switching_dialogpt_forward.5
$region0: #{switching_dialogpt_forward.5}
  #allocation0 [shape = 'u32[]', space=smem, size = 0x4, offset = 0x4, fixed_abs, tag = 'smem constant byte address 0x4 - core index']
  #allocation1 [shape = 'u32[72,128]{1,0:T(1,128)}', space=vmem, size = 0x9000, scoped, tag = 'internal scratch']
  #allocation2 [shape = 'f32[16,1]{1,0:T(8,128)}', space=vmem, size = 0x2000, scoped, tag = 'scratch operand']
  #allocation3 [shape = 'f32[16,1]{1,0:T(8,128)}', space=vmem, size = 0x2000, scoped, tag = 'scratch operand']
  #allocation4 [shape = 'f32[16,1]{1,0:T(8,128)}', space=vmem, size = 0x2000, scoped, tag = 'scratch operand']
  %s0 = inlined_call_operand.vmem [shape: bf16[16,128], index: 0, kind: input, shape index: {}]
  %s1 = inlined_call_operand.vmem [shape: s32[16,1], index: 1, kind: input, shape index: {}]
  %s2 = inlined_call_operand.vmem [shape: f32[16,1], index: 2, kind: output, shape index: {}]
  %s3 = sld [smem:[#allocation0]]
  $region26: #{switching_dialogpt_forward.5} parent=0
    _
  %s5 = ssub.s32 1, %s3
  %s6 = scalar_select 0, %s5, %s3
  // Predicated region
  $region2: #{switching_dialogpt_forward.5} parent=0 // pred_check
    _
  $region3: #{switching_dialogpt_forward.5} parent=0 // pred_check_branch
    %8 = sbr.rel (0) target = $region5
  $region4: #{switching_dialogpt_forward.5} parent=0 // pred_region
    _
  $region5: #{switching_dialogpt_forward.5} parent=0 // pred_fallthru
    _
  // Predicated region
  $region6: #{switching_dialogpt_forward.5} parent=0 // pred_check
    _
  $region7: #{switching_dialogpt_forward.5} parent=0 // pred_check_branch
    %10 = sbr.rel (0) target = $region9
  $region8: #{switching_dialogpt_forward.5} parent=0 // pred_region
    _
  $region9: #{switching_dialogpt_forward.5} parent=0 // pred_fallthru
    _
  %p11 = scmp.eq.s32.totalorder 0, 0
  // Predicated region
  $region10: #{switching_dialogpt_forward.5} parent=0 // pred_check
    %p12 = pneg %p11
  $region11: #{switching_dialogpt_forward.5} parent=0 // pred_check_branch
    %14 = sbr.rel (%p12) target = $region13
  $region12: #{switching_dialogpt_forward.5} parent=0 // pred_region
    %vm15 = vcmask 7168
    %16 = vst.msk [vmem:[#allocation2] sm:$0xff] %vm15, -1e+30
    %17 = vst.msk [vmem:[#allocation2 + $0x8] sm:$0xff] %vm15, -1e+30
    %18 = vst.msk [vmem:[#allocation3] sm:$0xff] %vm15, 0.0
    %19 = vst.msk [vmem:[#allocation3 + $0x8] sm:$0xff] %vm15, 0.0
    %20 = vst.msk [vmem:[#allocation4] sm:$0xff] %vm15, 0.0
    %21 = vst.msk [vmem:[#allocation4 + $0x8] sm:$0xff] %vm15, 0.0
  $region13: #{switching_dialogpt_forward.5} parent=0 // pred_fallthru
    _
  %v22 = vld [vmem:[%s0] sm:$0xf]
  %v23 = vld [vmem:[%s0 + $0x4] sm:$0xf]
  %v24 = vunpack.c.l.bf16 %v22
  %v25 = vunpack.c.l.bf16 %v23
  %s26 = smul.u32 0, 128
  %v27 = vlaneseq
  %v28 = vand.u32 %v27, 127
  %v29 = vstv %s26
  %v30 = vadd.s32 %v29, %v28
  %vm31 = vcmp.lt.s32.totalorder %v30, 128
  %v32 = vsel %vm31, %v24, -1e+30
  %v33 = vsel %vm31, %v25, -1e+30
  %v34 = vld [vmem:[%s1] sm:$0xff]
  %v35 = vld [vmem:[%s1 + $0x8] sm:$0xff]
  %v36 = vld [vmem:[#allocation2] sm:$0xff]
  %v37 = vld [vmem:[#allocation2 + $0x8] sm:$0xff]
  %38 = vmax.xlane.f32.xlu0 %v32
  %v39 = vpop.xlane.xlu0 %38
  %40 = vmax.xlane.f32.xlu0 %v33
  %v41 = vpop.xlane.xlu0 %40
  %v42 = vmax.f32 %v36, %v39
  %v43 = vmax.f32 %v37, %v41
  %v44 = vld [vmem:[#allocation3] sm:$0xff]
  %v45 = vld [vmem:[#allocation3 + $0x8] sm:$0xff]
  %v46 = vsub.f32 %v36, %v42
  %v47 = vsub.f32 %v37, %v43
  %v48 = vmul.f32 %v46, 1.442695
  %v49 = vpow.pop %v48
  %v50 = vmul.f32 %v47, 1.442695
  %v51 = vpow.pop %v50
  %v52 = vmul.f32 %v44, %v49
  %v53 = vmul.f32 %v45, %v51
  %55 = vset.pattern.permute.xlu0 0
  %56 = vperm.xlu0 %55, %v42
  %v57 = vpop.permute.xlu0 %56
  %60 = vset.pattern.permute.xlu0 0
  %61 = vperm.xlu0 %60, %v43
  %v62 = vpop.permute.xlu0 %61
  %v64 = vsub.f32 %v32, %v57
  %v65 = vsub.f32 %v33, %v62
  %v66 = vmul.f32 %v64, 1.442695
  %v67 = vpow.pop %v66
  %v68 = vmul.f32 %v65, 1.442695
  %v69 = vpow.pop %v68
  %70 = vadd.xlane.f32.xlu0 %v67
  %v71 = vpop.xlane.xlu0 %70
  %72 = vadd.xlane.f32.xlu0 %v69
  %v73 = vpop.xlane.xlu0 %72
  %v74 = vadd.f32 %v52, %v71
  %v75 = vadd.f32 %v53, %v73
  %vm76 = vcmask 7168
  %77 = vst.msk [vmem:[#allocation3] sm:$0xff] %vm76, %v74
  %78 = vst.msk [vmem:[#allocation3 + $0x8] sm:$0xff] %vm76, %v75
  %79 = vst.msk [vmem:[#allocation2] sm:$0xff] %vm76, %v42
  %80 = vst.msk [vmem:[#allocation2 + $0x8] sm:$0xff] %vm76, %v43
  %v81 = vld [vmem:[#allocation4] sm:$0xff]
  %v82 = vld [vmem:[#allocation4 + $0x8] sm:$0xff]
  %83 = vset.pattern.permute.xlu0 0
  %84 = vperm.xlu0 %83, %v34
  %v85 = vpop.permute.xlu0 %84
  %86 = vset.pattern.permute.xlu0 0
  %87 = vperm.xlu0 %86, %v35
  %v88 = vpop.permute.xlu0 %87
  %vm89 = vcmp.eq.s32.totalorder %v30, %v85
  %vm90 = vcmp.eq.s32.totalorder %v30, %v88
  %v91 = vsel %vm89, %v32, 0.0
  %v92 = vsel %vm90, %v33, 0.0
  %93 = vadd.xlane.f32.xlu0 %v91
  %v94 = vpop.xlane.xlu0 %93
  %95 = vadd.xlane.f32.xlu0 %v92
  %v96 = vpop.xlane.xlu0 %95
  %v97 = vadd.f32 %v81, %v94
  %v98 = vadd.f32 %v82, %v96
  %99 = vst.msk [vmem:[#allocation4] sm:$0xff] %vm76, %v97
  %100 = vst.msk [vmem:[#allocation4 + $0x8] sm:$0xff] %vm76, %v98
  // Predicated region
  $region14: #{switching_dialogpt_forward.5} parent=0 // pred_check
    %p101 = pneg %p11
  $region15: #{switching_dialogpt_forward.5} parent=0 // pred_check_branch
    %103 = sbr.rel (%p101) target = $region17
  $region16: #{switching_dialogpt_forward.5} parent=0 // pred_region
    %v104 = vld [vmem:[#allocation2] sm:$0xff]
    %v105 = vld [vmem:[#allocation2 + $0x8] sm:$0xff]
    %v106 = vld [vmem:[#allocation3] sm:$0xff]
    %v107 = vld [vmem:[#allocation3 + $0x8] sm:$0xff]
    %v108 = vlog2.pop %v106
    %v109 = vmul.f32 %v108, 0.6931472
    %v110 = vlog2.pop %v107
    %v111 = vmul.f32 %v110, 0.6931472
    %v112 = vadd.f32 %v104, %v109
    %v113 = vadd.f32 %v105, %v111
    %v114 = vld [vmem:[#allocation4] sm:$0xff]
    %v115 = vld [vmem:[#allocation4 + $0x8] sm:$0xff]
    %v116 = vsub.f32 %v112, %v114
    %v117 = vsub.f32 %v113, %v115
    %118 = vst.msk [vmem:[%s2] sm:$0xff] %vm76, %v116
    %119 = vst.msk [vmem:[%s2 + $0x8] sm:$0xff] %vm76, %v117
  $region17: #{switching_dialogpt_forward.5} parent=0 // pred_fallthru
    _
  // Predicated region
  $region18: #{switching_dialogpt_forward.5} parent=0 // pred_check
    _
  $region19: #{switching_dialogpt_forward.5} parent=0 // pred_check_branch
    %121 = sbr.rel (0) target = $region21
  $region20: #{switching_dialogpt_forward.5} parent=0 // pred_region
    _
  $region21: #{switching_dialogpt_forward.5} parent=0 // pred_fallthru
    _
  // Predicated region
  $region22: #{switching_dialogpt_forward.5} parent=0 // pred_check
    _
  $region23: #{switching_dialogpt_forward.5} parent=0 // pred_check_branch
    %123 = sbr.rel (0) target = $region25
  $region24: #{switching_dialogpt_forward.5} parent=0 // pred_region
    _
  $region25: #{switching_dialogpt_forward.5} parent=0 // pred_fallthru
    _

</llo_original>
